<compile_context>
chip_gen: v5e
topology: v5e:2x2
jax: 0.10.0
libtpu: 0.0.40
codegen_flags: <defaults>
</compile_context>

<pallas_src>
import functools
import math

import jax
import jax.numpy as jnp
from jax.experimental import pallas as pl
from jax.experimental.pallas import tpu as pltpu


def _adacos_kernel(x_ref, wt_ref, label_ref, mixed_ref, clip_ref, bsum_ref,
                   *, m, s_init, ls_eps, out_features, tile_c):
    j = pl.program_id(0)

    # ---- F.normalize(x, dim=1) in f32 via rsqrt (EUP slot, no VPU divide) ----
    # v / max(||v||, 1e-12)  ==  v * rsqrt(max(sum(v^2), 1e-24))
    x = x_ref[...].astype(jnp.float32)                              # (B, D)
    x_inv = jax.lax.rsqrt(jnp.maximum(
        jnp.sum(x * x, axis=1, keepdims=True), 1e-24))              # (B, 1)
    xn = (x * x_inv).astype(jnp.bfloat16)                           # (B, D) bf16

    # ---- normalize this (D, tC) weight tile column-wise (classes on lanes) ----
    w = wt_ref[...].astype(jnp.float32)                             # (D, tC)
    w_inv = jax.lax.rsqrt(jnp.maximum(
        jnp.sum(w * w, axis=0, keepdims=True), 1e-24))              # (1, tC)
    wn = (w * w_inv).astype(jnp.bfloat16)                           # (D, tC) bf16

    # ---- (B, D) x (D, tC) on the MXU, f32 accumulation, lane-dense output ----
    logits = jax.lax.dot_general(
        xn, wn, (((1,), (0,)), ((), ())),
        preferred_element_type=jnp.float32)                         # (B, tC)

    clipped = jnp.clip(logits, -1.0 + 1e-07, 1.0 - 1e-07)
    # cos(arccos(c) + m) = c*cos(m) - sqrt(1 - c^2)*sin(m)
    sin_theta = jnp.sqrt(jnp.maximum(1.0 - clipped * clipped, 0.0))
    target_logits = clipped * math.cos(m) - sin_theta * math.sin(m)

    B = logits.shape[0]
    labels = label_ref[...]                                         # (B, 1) int32
    col = jax.lax.broadcasted_iota(jnp.int32, (B, tile_c), 1) + j * tile_c
    one_hot = (col == labels).astype(jnp.float32)
    if ls_eps > 0:
        one_hot = (1.0 - ls_eps) * one_hot + ls_eps / out_features

    mixed_ref[...] = logits * (1.0 - one_hot) + target_logits * one_hot
    clip_ref[...] = clipped

    # Per-tile partial of sum(exp(s_old * logits)) over entries with one_hot<1.
    # (With ls_eps>0 this intentionally includes target entries, matching the
    # original PyTorch module.)
    b_avg = jnp.where(one_hot < 1.0, jnp.exp(s_init * logits), 0.0)
    part = jnp.sum(jnp.sum(b_avg, axis=1, keepdims=True),
                   axis=0, keepdims=True)                           # (1, 1)
    bsum_ref[...] = jnp.broadcast_to(part, (8, 128))                # padded store


def adacos_forward(x, label, weight, *, m=0.5, ls_eps=0.0,
                   theta_zero=math.pi / 4, tile_c=None):
    B, D = x.shape
    C, D2 = weight.shape
    assert D == D2
    s_init = math.log(C - 1) / math.cos(theta_zero)

    # Pick a lane-dense class tile that divides C.  (For ragged C, pad the
    # classes to a multiple of 128 outside the kernel.)
    if tile_c is None:
        tile_c = 512
        while C % tile_c:
            tile_c //= 2
    assert C % tile_c == 0 and tile_c % 128 == 0, (C, tile_c)
    num_tiles = C // tile_c

    # (D, C) bf16 weight: lane-dense classes, halved HBM stream, MXU-native
    # (K, N) orientation.  x stays f32 for the normalization math.
    wt = weight.T.astype(jnp.bfloat16)
    label2d = label.astype(jnp.int32).reshape(B, 1)

    kernel = functools.partial(_adacos_kernel, m=m, s_init=s_init,
                               ls_eps=ls_eps, out_features=C, tile_c=tile_c)

    mixed, clipped, bsum = pl.pallas_call(
        kernel,
        out_shape=(jax.ShapeDtypeStruct((B, C), jnp.float32),
                   jax.ShapeDtypeStruct((B, C), jnp.float32),
                   jax.ShapeDtypeStruct((num_tiles * 8, 128), jnp.float32)),
        grid=(num_tiles,),
        in_specs=[pl.BlockSpec((B, D), lambda j: (0, 0)),        # grid-invariant
                  pl.BlockSpec((D, tile_c), lambda j: (0, j)),   # streamed
                  pl.BlockSpec((B, 1), lambda j: (0, 0))],       # grid-invariant
        out_specs=(pl.BlockSpec((B, tile_c), lambda j: (0, j)),
                   pl.BlockSpec((B, tile_c), lambda j: (0, j)),
                   pl.BlockSpec((8, 128), lambda j: (j, 0))),
        compiler_params=pltpu.CompilerParams(
            dimension_semantics=("parallel",),
            vmem_limit_bytes=64 * 1024 * 1024),
    )(x.astype(jnp.float32), wt, label2d)

    # ---- glue: adaptive scale update (torch no_grad block) ----
    # torch.median(theta) for n elements is the lower middle value, i.e. the
    # ((n-1)//2)-th smallest theta.  arccos is monotone decreasing, so this is
    # arccos of the k-th LARGEST clipped cosine, k = (n+1)//2.  Partial top_k
    # selection avoids a full sort and a full (B, C) arccos pass.
    n = B * C
    k = (n + 1) // 2
    top_vals, _ = jax.lax.top_k(clipped.reshape(-1), k)
    theta_med = jnp.arccos(top_vals[k - 1])

    b_avg = jnp.sum(bsum[::8, 0]) / B        # one partial per class tile
    s_new = jnp.log(b_avg) / jnp.cos(jnp.minimum(theta_zero, theta_med))
    return mixed * s_new                      # output *= self.s (updated s)


def adacos_reference(x, label, weight, *, m=0.5, ls_eps=0.0,
                     theta_zero=math.pi / 4):
    """Pure-JAX mirror of the PyTorch forward (with the same bf16 matmul path
    the kernel intentionally uses), for validation."""
    B, D = x.shape
    C, _ = weight.shape
    s = math.log(C - 1) / math.cos(theta_zero)
    xn = x / jnp.maximum(jnp.linalg.norm(x, axis=1, keepdims=True), 1e-12)
    wq = weight.astype(jnp.bfloat16).astype(jnp.float32)   # bf16 weight stream
    wn = wq / jnp.maximum(jnp.linalg.norm(wq, axis=1, keepdims=True), 1e-12)
    logits = jnp.dot(xn.astype(jnp.bfloat16), wn.astype(jnp.bfloat16).T,
                     preferred_element_type=jnp.float32)
    theta = jnp.arccos(jnp.clip(logits, -1.0 + 1e-07, 1.0 - 1e-07))
    target_logits = jnp.cos(theta + m)
    one_hot = jax.nn.one_hot(label, C, dtype=jnp.float32)
    if ls_eps > 0:
        one_hot = (1 - ls_eps) * one_hot + ls_eps / C
    output = logits * (1 - one_hot) + target_logits * one_hot
    b_avg = jnp.where(one_hot < 1, jnp.exp(s * logits), 0.0)
    b_avg = jnp.sum(b_avg) / B
    flat = jnp.sort(theta.reshape(-1))
    theta_med = flat[(flat.shape[0] - 1) // 2]   # torch.median: lower median
    s_new = jnp.log(b_avg) / jnp.cos(jnp.minimum(theta_zero, theta_med))
    return output * s_new


if __name__ == "__main__":
    # Small shapes, but C > tile_c so the multi-tile path (global column
    # offsets + per-tile B_avg partials) is actually exercised.
    B, in_features, out_features = 8, 64, 256

    key = jax.random.PRNGKey(0)
    kx, kw, kl = jax.random.split(key, 3)

    x = jax.random.normal(kx, (B, in_features), dtype=jnp.float32)
    # deterministic xavier_uniform_-style init for weight (out_features, in_features)
    a = math.sqrt(6.0 / (in_features + out_features))
    weight = jax.random.uniform(kw, (out_features, in_features),
                                minval=-a, maxval=a, dtype=jnp.float32)
    label = jax.random.randint(kl, (B,), 0, out_features, dtype=jnp.int32)

    out = adacos_forward(x, label, weight, tile_c=128)
    out = jax.block_until_ready(out)

    ref = adacos_reference(x, label, weight)
    assert out.shape == (B, out_features)
    assert jnp.allclose(out, ref, rtol=2e-3, atol=2e-3), (
        float(jnp.max(jnp.abs(out - ref))))

    print("KERNEL_OK")
</pallas_src>

<mosaic_0001>
module attributes {stable_mosaic.version = 11 : i64} {
  func.func @_adacos_kernel(%arg0: i32, %arg1: memref<8x64xf32, #tpu.memory_space<vmem>>, %arg2: memref<64x128xbf16, #tpu.memory_space<vmem>>, %arg3: memref<8x1xi32, #tpu.memory_space<vmem>>, %arg4: memref<8x128xf32, #tpu.memory_space<vmem>>, %arg5: memref<8x128xf32, #tpu.memory_space<vmem>>, %arg6: memref<8x128xf32, #tpu.memory_space<vmem>>) attributes {dimension_semantics = [#tpu.dimension_semantics<parallel>], iteration_bounds = array<i64: 2>, scalar_prefetch = 0 : i64, scratch_operands = 0 : i64, tpu.core_type = #tpu.core_type<tc>, window_params = [{pipeline_mode = #tpu.pipeline_mode<synchronous>, transform_indices = @transform_0, window_bounds = array<i64: 8, 64>}, {transform_indices = @transform_1, window_bounds = array<i64: 64, 128>}, {pipeline_mode = #tpu.pipeline_mode<synchronous>, transform_indices = @transform_2, window_bounds = array<i64: 8, 1>}, {transform_indices = @transform_3, window_bounds = array<i64: 8, 128>}, {transform_indices = @transform_4, window_bounds = array<i64: 8, 128>}, {transform_indices = @transform_5, window_bounds = array<i64: 8, 128>}]} {
    %c0 = arith.constant 0 : index
    %c0_0 = arith.constant 0 : index
    %0 = vector.load %arg1[%c0, %c0_0] : memref<8x64xf32, #tpu.memory_space<vmem>>, vector<8x64xf32>
    %1 = arith.mulf %0, %0 : vector<8x64xf32>
    %cst = arith.constant dense<0.000000e+00> : vector<8xf32>
    %2 = vector.multi_reduction <add>, %1, %cst [1] : vector<8x64xf32> to vector<8xf32>
    %3 = vector.shape_cast %2 : vector<8xf32> to vector<8x1xf32>
    %cst_1 = arith.constant 1.000000e-24 : f32
    %4 = vector.broadcast %cst_1 : f32 to vector<8x1xf32>
    %5 = arith.maximumf %3, %4 : vector<8x1xf32>
    %6 = math.rsqrt %5 : vector<8x1xf32>
    %7 = vector.broadcast %6 : vector<8x1xf32> to vector<8x64xf32>
    %8 = arith.mulf %0, %7 : vector<8x64xf32>
    %9 = arith.truncf %8 : vector<8x64xf32> to vector<8x64xbf16>
    %c0_2 = arith.constant 0 : index
    %c0_3 = arith.constant 0 : index
    %10 = vector.load %arg2[%c0_2, %c0_3] : memref<64x128xbf16, #tpu.memory_space<vmem>>, vector<64x128xbf16>
    %11 = arith.extf %10 : vector<64x128xbf16> to vector<64x128xf32>
    %12 = arith.mulf %11, %11 : vector<64x128xf32>
    %cst_4 = arith.constant dense<0.000000e+00> : vector<128xf32>
    %13 = vector.multi_reduction <add>, %12, %cst_4 [0] : vector<64x128xf32> to vector<128xf32>
    %14 = vector.shape_cast %13 : vector<128xf32> to vector<1x128xf32>
    %cst_5 = arith.constant 1.000000e-24 : f32
    %15 = vector.broadcast %cst_5 : f32 to vector<1x128xf32>
    %16 = arith.maximumf %14, %15 : vector<1x128xf32>
    %17 = math.rsqrt %16 : vector<1x128xf32>
    %18 = vector.broadcast %17 : vector<1x128xf32> to vector<64x128xf32>
    %19 = arith.mulf %11, %18 : vector<64x128xf32>
    %20 = arith.truncf %19 : vector<64x128xf32> to vector<64x128xbf16>
    %cst_6 = arith.constant dense<0.000000e+00> : vector<8x128xf32>
    %21 = tpu.matmul %9, %20, %cst_6 {dimension_numbers = #tpu.dot_dimension_numbers<[1], [0], [0], [1], [0, 0, 1, 1], [], []>} : vector<8x64xbf16>, vector<64x128xbf16>, vector<8x128xf32> -> vector<8x128xf32>
    %cst_7 = arith.constant -0.99999988 : f32
    %cst_8 = arith.constant 0.99999988 : f32
    %22 = vector.broadcast %cst_7 : f32 to vector<8x128xf32>
    %23 = arith.maximumf %22, %21 : vector<8x128xf32>
    %24 = vector.broadcast %cst_8 : f32 to vector<8x128xf32>
    %25 = arith.minimumf %24, %23 : vector<8x128xf32>
    %26 = arith.mulf %25, %25 : vector<8x128xf32>
    %cst_9 = arith.constant 1.000000e+00 : f32
    %27 = vector.broadcast %cst_9 : f32 to vector<8x128xf32>
    %28 = arith.subf %27, %26 : vector<8x128xf32>
    %cst_10 = arith.constant 0.000000e+00 : f32
    %29 = vector.broadcast %cst_10 : f32 to vector<8x128xf32>
    %30 = arith.maximumf %28, %29 : vector<8x128xf32>
    %31 = math.sqrt %30 : vector<8x128xf32>
    %cst_11 = arith.constant 0.87758255 : f32
    %32 = vector.broadcast %cst_11 : f32 to vector<8x128xf32>
    %33 = arith.mulf %25, %32 : vector<8x128xf32>
    %cst_12 = arith.constant 0.47942555 : f32
    %34 = vector.broadcast %cst_12 : f32 to vector<8x128xf32>
    %35 = arith.mulf %31, %34 : vector<8x128xf32>
    %36 = arith.subf %33, %35 : vector<8x128xf32>
    %c0_13 = arith.constant 0 : index
    %c0_14 = arith.constant 0 : index
    %37 = vector.load %arg3[%c0_13, %c0_14] : memref<8x1xi32, #tpu.memory_space<vmem>>, vector<8x1xi32>
    %38 = tpu.iota {dimensions = array<i32: 1>} : vector<8x128xi32>
    %c128_i32 = arith.constant 128 : i32
    %39 = arith.muli %arg0, %c128_i32 : i32
    %40 = vector.broadcast %39 : i32 to vector<8x128xi32>
    %41 = arith.addi %38, %40 : vector<8x128xi32>
    %42 = vector.broadcast %37 : vector<8x1xi32> to vector<8x128xi32>
    %43 = arith.cmpi eq, %41, %42 : vector<8x128xi32>
    %44 = arith.extui %43 : vector<8x128xi1> to vector<8x128xi32>
    %45 = arith.sitofp %44 : vector<8x128xi32> to vector<8x128xf32>
    %cst_15 = arith.constant 1.000000e+00 : f32
    %46 = vector.broadcast %cst_15 : f32 to vector<8x128xf32>
    %47 = arith.subf %46, %45 : vector<8x128xf32>
    %48 = arith.mulf %21, %47 : vector<8x128xf32>
    %49 = arith.mulf %36, %45 : vector<8x128xf32>
    %50 = arith.addf %48, %49 : vector<8x128xf32>
    %c0_16 = arith.constant 0 : index
    %c0_17 = arith.constant 0 : index
    %51 = vector.load %arg4[%c0_16, %c0_17] : memref<8x128xf32, #tpu.memory_space<vmem>>, vector<8x128xf32>
    tpu.vector_store %arg4[%c0_16, %c0_17], %50 {strides = array<i32>} : memref<8x128xf32, #tpu.memory_space<vmem>>, vector<8x128xf32>,
    %c0_18 = arith.constant 0 : index
    %c0_19 = arith.constant 0 : index
    %52 = vector.load %arg5[%c0_18, %c0_19] : memref<8x128xf32, #tpu.memory_space<vmem>>, vector<8x128xf32>
    tpu.vector_store %arg5[%c0_18, %c0_19], %25 {strides = array<i32>} : memref<8x128xf32, #tpu.memory_space<vmem>>, vector<8x128xf32>,
    %cst_20 = arith.constant 1.000000e+00 : f32
    %53 = vector.broadcast %cst_20 : f32 to vector<8x128xf32>
    %54 = arith.cmpf olt, %45, %53 : vector<8x128xf32>
    %cst_21 = arith.constant 7.836530e+00 : f32
    %55 = vector.broadcast %cst_21 : f32 to vector<8x128xf32>
    %56 = arith.mulf %55, %21 : vector<8x128xf32>
    %57 = math.exp %56 : vector<8x128xf32>
    %cst_22 = arith.constant 0.000000e+00 : f32
    %58 = vector.broadcast %cst_22 : f32 to vector<8x128xf32>
    %59 = arith.select %54, %57, %58 : vector<8x128xi1>, vector<8x128xf32>
    %cst_23 = arith.constant dense<0.000000e+00> : vector<8xf32>
    %60 = vector.multi_reduction <add>, %59, %cst_23 [1] : vector<8x128xf32> to vector<8xf32>
    %61 = vector.shape_cast %60 : vector<8xf32> to vector<8x1xf32>
    %cst_24 = arith.constant dense<0.000000e+00> : vector<1xf32>
    %62 = vector.multi_reduction <add>, %61, %cst_24 [0] : vector<8x1xf32> to vector<1xf32>
    %63 = vector.shape_cast %62 : vector<1xf32> to vector<1x1xf32>
    %64 = vector.shape_cast %63 : vector<1x1xf32> to vector<1x1xf32>
    %65 = vector.broadcast %64 : vector<1x1xf32> to vector<8x128xf32>
    %c0_25 = arith.constant 0 : index
    %c0_26 = arith.constant 0 : index
    %66 = vector.load %arg6[%c0_25, %c0_26] : memref<8x128xf32, #tpu.memory_space<vmem>>, vector<8x128xf32>
    tpu.vector_store %arg6[%c0_25, %c0_26], %65 {strides = array<i32>} : memref<8x128xf32, #tpu.memory_space<vmem>>, vector<8x128xf32>,
    return
  }
  func.func @transform_0(%arg0: i32) -> (i32, i32) {
    %c0_i32 = arith.constant 0 : i32
    %c0_i32_0 = arith.constant 0 : i32
    %c0_i32_1 = arith.constant 0 : i32
    return %c0_i32, %c0_i32_0 : i32, i32
  }
  func.func @transform_1(%arg0: i32) -> (i32, i32) {
    %c0_i32 = arith.constant 0 : i32
    %c0_i32_0 = arith.constant 0 : i32
    return %c0_i32, %arg0 : i32, i32
  }
  func.func @transform_2(%arg0: i32) -> (i32, i32) {
    %c0_i32 = arith.constant 0 : i32
    %c0_i32_0 = arith.constant 0 : i32
    %c0_i32_1 = arith.constant 0 : i32
    return %c0_i32, %c0_i32_0 : i32, i32
  }
  func.func @transform_3(%arg0: i32) -> (i32, i32) {
    %c0_i32 = arith.constant 0 : i32
    %c0_i32_0 = arith.constant 0 : i32
    return %c0_i32, %arg0 : i32, i32
  }
  func.func @transform_4(%arg0: i32) -> (i32, i32) {
    %c0_i32 = arith.constant 0 : i32
    %c0_i32_0 = arith.constant 0 : i32
    return %c0_i32, %arg0 : i32, i32
  }
  func.func @transform_5(%arg0: i32) -> (i32, i32) {
    %c0_i32 = arith.constant 0 : i32
    %c0_i32_0 = arith.constant 0 : i32
    return %arg0, %c0_i32 : i32, i32
  }
}

</mosaic_0001>

<llo_original>
// kernel: tpu_custom_call.1
$region0: #{tpu_custom_call.1}
  #allocation0 [shape = 'u32[]', space=smem, size = 0x4, offset = 0x4, fixed_abs, tag = 'smem constant byte address 0x4 - core index']
  #allocation1 [shape = 'u32[72,128]{1,0:T(1,128)}', space=vmem, size = 0x9000, scoped, tag = 'internal scratch']
  %s0 = inlined_call_operand.vmem [shape: f32[8,64], index: 0, kind: input, shape index: {}]
  %s1 = inlined_call_operand.hbm [shape: bf16[64,256], index: 1, kind: input, shape index: {}]
  %s2 = inlined_call_operand.vmem [shape: s32[8,1], index: 2, kind: input, shape index: {}]
  %s3 = inlined_call_operand.hbm [shape: f32[8,256], index: 3, kind: output, shape index: {0}]
  %s4 = inlined_call_operand.hbm [shape: f32[8,256], index: 4, kind: output, shape index: {1}]
  %s5 = inlined_call_operand.hbm [shape: f32[16,128], index: 5, kind: output, shape index: {2}]
  %6 = xla_tuple %s3, %s4, %s5
  %s7 = sld [smem:[#allocation0]]
  $region65: #{tpu_custom_call.1} parent=0
    _
  %s9 = ssub.s32 1, %s7
  %s10 = scalar_select 0, %s9, %s7
  $region1: #{tpu_custom_call.1} parent=0
    #allocation2 [shape = 'u8[32768]{0}', space=vmem, size = 0x8000, scoped, tag = 'input window, operand 1']
    #allocation3 [shape = 's32[2]{0}', space=sflag, size = 0x8, scoped, tag = 'scoped memory for tpu_custom_call.1']
    #allocation4 [shape = 's32[2]{0}', space=sflag, size = 0x8, scoped, tag = 'scoped memory for tpu_custom_call.1']
    #allocation5 [shape = 'u8[8192]{0}', space=vmem, size = 0x2000, scoped, tag = 'output window, operand 0']
    #allocation6 [shape = 'u8[8192]{0}', space=vmem, size = 0x2000, scoped, tag = 'output window, operand 1']
    #allocation7 [shape = 's32[2]{0}', space=sflag, size = 0x8, scoped, tag = 'scoped memory for tpu_custom_call.1']
    #allocation8 [shape = 'u8[8192]{0}', space=vmem, size = 0x2000, scoped, tag = 'output window, operand 2']
    %11 = vsyncpa [#allocation3], 0
    %s12 = scalar_lea.sflag [#allocation3], 1
    %13 = vsyncpa %s12, 0
    %14 = vsyncpa [#allocation4], 0
    %s15 = scalar_lea.sflag [#allocation4], 1
    %16 = vsyncpa %s15, 0
    %17 = vsyncpa [#allocation7], 0
    %s18 = scalar_lea.sflag [#allocation7], 1
    %19 = vsyncpa %s18, 0
    loop: start=0, step=1, limit=4
    $region2: #{tpu_custom_call.1} parent=1 // loop_pre_header
      _
    $region3: #{tpu_custom_call.1} parent=1 // loop_header
      %s21 = sphi 0, %s25
      %p22 = scmp.ge.s32.totalorder %s21, 4
      %s29 = sphi 0, %s29
      %s31 = sphi 0, %s29
      %s32 = sphi 0, %s31
      %s46 = sphi 0, %s32
      %s52 = sphi 0, %s54
      %s55 = sphi 0, %s52
      %s56 = sphi 0, %s55
      %s72 = sphi 0, %s56
      %s76 = sphi 0, %s76
      %s78 = sphi 0, %s76
      %s79 = sphi 0, %s78
      %s93 = sphi 0, %s79
      %s99 = sphi 0, %s101
      %s102 = sphi 0, %s99
      %s103 = sphi 0, %s102
      %s119 = sphi 0, %s103
      %s125 = sphi 0, %s127
      %s128 = sphi 0, %s125
      %s129 = sphi 0, %s128
      %s145 = sphi 0, %s129
      %s151 = sphi 0, %s153
      %s154 = sphi 0, %s151
      %s155 = sphi 0, %s154
      %s171 = sphi 0, %s155
    $region4: #{tpu_custom_call.1} parent=1 // loop_header_branch
      %24 = sbr.rel (%p22) target = $region8
    $region5: #{tpu_custom_call.1} parent=1 // loop_body
      %s26 = ssub.s32 %s21, 1
      %s27 = ssub.s32 %s21, 2
      %s28 = sadd.s32 %s21, 1
      %s30 = sadd.s32 %s29, 1
      %p33 = scmp.eq.s32.totalorder %s21, 1
      %p34 = scmp.ne.s32.totalorder %s29, %s31
      %p35 = scmp.eq.s32.totalorder %s21, 0
      %p36 = por %p34, %p35
      %p37 = scmp.ne.s32.totalorder %s29, %s31
      %p38 = scmp.eq.s32.totalorder %s26, 1
      %p39 = por %p37, %p38
      %p40 = scmp.ne.s32.totalorder %s31, %s32
      %p41 = scmp.eq.s32.totalorder %s26, 0
      %p42 = por %p40, %p41
      %p43 = scmp.ne.s32.totalorder %s31, %s32
      %p44 = scmp.eq.s32.totalorder %s27, 1
      %p45 = por %p43, %p44
      %p47 = scmp.ne.s32.totalorder %s32, %s46
      %p48 = scmp.eq.s32.totalorder %s27, 0
      %p49 = por %p47, %p48
      %s50 = ssub.s32 %s21, %s28
      %p51 = scmp.eq.s32.totalorder %s50, 0
      %s53 = sadd.s32 %s52, 1
      %s54 = scalar_select %p51, %s52, %s53
      %p57 = pneg %p51
      %p58 = scmp.eq.s32.totalorder %s21, 1
      %p59 = por %p57, %p58
      %p60 = scmp.ne.s32.totalorder %s52, %s55
      %p61 = scmp.eq.s32.totalorder %s21, 0
      %p62 = por %p60, %p61
      %p63 = scmp.ne.s32.totalorder %s52, %s55
      %p64 = scmp.eq.s32.totalorder %s26, 1
      %p65 = por %p63, %p64
      %p66 = scmp.ne.s32.totalorder %s55, %s56
      %p67 = scmp.eq.s32.totalorder %s26, 0
      %p68 = por %p66, %p67
      %p69 = scmp.ne.s32.totalorder %s55, %s56
      %p70 = scmp.eq.s32.totalorder %s27, 1
      %p71 = por %p69, %p70
      %p73 = scmp.ne.s32.totalorder %s56, %s72
      %p74 = scmp.eq.s32.totalorder %s27, 0
      %p75 = por %p73, %p74
      %s77 = sadd.s32 %s76, 1
      %p80 = scmp.eq.s32.totalorder %s21, 1
      %p81 = scmp.ne.s32.totalorder %s76, %s78
      %p82 = scmp.eq.s32.totalorder %s21, 0
      %p83 = por %p81, %p82
      %p84 = scmp.ne.s32.totalorder %s76, %s78
      %p85 = scmp.eq.s32.totalorder %s26, 1
      %p86 = por %p84, %p85
      %p87 = scmp.ne.s32.totalorder %s78, %s79
      %p88 = scmp.eq.s32.totalorder %s26, 0
      %p89 = por %p87, %p88
      %p90 = scmp.ne.s32.totalorder %s78, %s79
      %p91 = scmp.eq.s32.totalorder %s27, 1
      %p92 = por %p90, %p91
      %p94 = scmp.ne.s32.totalorder %s79, %s93
      %p95 = scmp.eq.s32.totalorder %s27, 0
      %p96 = por %p94, %p95
      %s97 = ssub.s32 %s21, %s28
      %p98 = scmp.eq.s32.totalorder %s97, 0
      %s100 = sadd.s32 %s99, 1
      %s101 = scalar_select %p98, %s99, %s100
      %p104 = pneg %p98
      %p105 = scmp.eq.s32.totalorder %s21, 1
      %p106 = por %p104, %p105
      %p107 = scmp.ne.s32.totalorder %s99, %s102
      %p108 = scmp.eq.s32.totalorder %s21, 0
      %p109 = por %p107, %p108
      %p110 = scmp.ne.s32.totalorder %s99, %s102
      %p111 = scmp.eq.s32.totalorder %s26, 1
      %p112 = por %p110, %p111
      %p113 = scmp.ne.s32.totalorder %s102, %s103
      %p114 = scmp.eq.s32.totalorder %s26, 0
      %p115 = por %p113, %p114
      %p116 = scmp.ne.s32.totalorder %s102, %s103
      %p117 = scmp.eq.s32.totalorder %s27, 1
      %p118 = por %p116, %p117
      %p120 = scmp.ne.s32.totalorder %s103, %s119
      %p121 = scmp.eq.s32.totalorder %s27, 0
      %p122 = por %p120, %p121
      %s123 = ssub.s32 %s21, %s28
      %p124 = scmp.eq.s32.totalorder %s123, 0
      %s126 = sadd.s32 %s125, 1
      %s127 = scalar_select %p124, %s125, %s126
      %p130 = pneg %p124
      %p131 = scmp.eq.s32.totalorder %s21, 1
      %p132 = por %p130, %p131
      %p133 = scmp.ne.s32.totalorder %s125, %s128
      %p134 = scmp.eq.s32.totalorder %s21, 0
      %p135 = por %p133, %p134
      %p136 = scmp.ne.s32.totalorder %s125, %s128
      %p137 = scmp.eq.s32.totalorder %s26, 1
      %p138 = por %p136, %p137
      %p139 = scmp.ne.s32.totalorder %s128, %s129
      %p140 = scmp.eq.s32.totalorder %s26, 0
      %p141 = por %p139, %p140
      %p142 = scmp.ne.s32.totalorder %s128, %s129
      %p143 = scmp.eq.s32.totalorder %s27, 1
      %p144 = por %p142, %p143
      %p146 = scmp.ne.s32.totalorder %s129, %s145
      %p147 = scmp.eq.s32.totalorder %s27, 0
      %p148 = por %p146, %p147
      %s149 = ssub.s32 %s21, %s28
      %p150 = scmp.eq.s32.totalorder %s149, 0
      %s152 = sadd.s32 %s151, 1
      %s153 = scalar_select %p150, %s151, %s152
      %p156 = pneg %p150
      %p157 = scmp.eq.s32.totalorder %s21, 1
      %p158 = por %p156, %p157
      %p159 = scmp.ne.s32.totalorder %s151, %s154
      %p160 = scmp.eq.s32.totalorder %s21, 0
      %p161 = por %p159, %p160
      %p162 = scmp.ne.s32.totalorder %s151, %s154
      %p163 = scmp.eq.s32.totalorder %s26, 1
      %p164 = por %p162, %p163
      %p165 = scmp.ne.s32.totalorder %s154, %s155
      %p166 = scmp.eq.s32.totalorder %s26, 0
      %p167 = por %p165, %p166
      %p168 = scmp.ne.s32.totalorder %s154, %s155
      %p169 = scmp.eq.s32.totalorder %s27, 1
      %p170 = por %p168, %p169
      %p172 = scmp.ne.s32.totalorder %s155, %s171
      %p173 = scmp.eq.s32.totalorder %s27, 0
      %p174 = por %p172, %p173
      %p175 = scmp.le.s32.totalorder 1, %s21
      %p176 = scmp.lt.s32.totalorder %s21, 3
      %p177 = pnand %p175, %p176
      %p178 = pneg %p177
      // Predicated region
      $region9: #{tpu_custom_call.1} parent=5 // pred_check
        _
      $region10: #{tpu_custom_call.1} parent=5 // pred_check_branch
        %180 = sbr.rel (%p177) target = $region12
      $region11: #{tpu_custom_call.1} parent=5 // pred_region
        %s181 = ssub.s32 %s21, 1
        // Predicated region
        $region13: #{tpu_custom_call.1} parent=11 // pred_check
          %p182 = pneg %p42
        $region14: #{tpu_custom_call.1} parent=11 // pred_check_branch
          %184 = sbr.rel (%p182) target = $region16
        $region15: #{tpu_custom_call.1} parent=11 // pred_region
          _
        $region16: #{tpu_custom_call.1} parent=11 // pred_fallthru
          _
        // Predicated region
        $region17: #{tpu_custom_call.1} parent=11 // pred_check
          %p185 = pneg %p89
        $region18: #{tpu_custom_call.1} parent=11 // pred_check_branch
          %187 = sbr.rel (%p185) target = $region20
        $region19: #{tpu_custom_call.1} parent=11 // pred_region
          _
        $region20: #{tpu_custom_call.1} parent=11 // pred_fallthru
          _
      $region12: #{tpu_custom_call.1} parent=5 // pred_fallthru
        _
      %p188 = scmp.lt.s32.totalorder %s21, 2
      // Predicated region
      $region21: #{tpu_custom_call.1} parent=5 // pred_check
        %p189 = pneg %p188
      $region22: #{tpu_custom_call.1} parent=5 // pred_check_branch
        %191 = sbr.rel (%p189) target = $region24
      $region23: #{tpu_custom_call.1} parent=5 // pred_region
        // Predicated region
        $region25: #{tpu_custom_call.1} parent=23 // pred_check
          %p192 = pneg %p62
        $region26: #{tpu_custom_call.1} parent=23 // pred_check_branch
          %194 = sbr.rel (%p192) target = $region28
        $region27: #{tpu_custom_call.1} parent=23 // pred_region
          %s195 = sand.u32 %s52, 1
          %s196 = scalar_lea.sflag [#allocation3], %s195
          %s197 = sand.u32 %s52, 1
          %s198 = smul.addr %s197, 32
          %s199 = scalar_lea.vmem [#allocation2], %s198
          %201 = vsyncadd %s196, 0
          %s202 = smul.addr %s21, 4
          %s203 = scalar_lea.hbm %s1, %s202
          %s204 = sshll.u32 %s203, 4
          %s205 = int_to_ptr.hbm [resolvable:$true] %s204
          %s206 = sshll.u32 %s199, 4
          %s207 = int_to_ptr.vmem [resolvable:$true] %s206
          %212 = dma.hbm_to_vmem [thread:$0]  %s205, 512, %s207, %s196, 128, 64, 4
        $region28: #{tpu_custom_call.1} parent=23 // pred_fallthru
          _
      $region24: #{tpu_custom_call.1} parent=5 // pred_fallthru
        _
      %p213 = scmp.le.s32.totalorder 1, %s21
      %p214 = scmp.lt.s32.totalorder %s21, 3
      %p215 = pnand %p213, %p214
      %p216 = pneg %p215
      // Predicated region
      $region29: #{tpu_custom_call.1} parent=5 // pred_check
        _
      $region30: #{tpu_custom_call.1} parent=5 // pred_check_branch
        %218 = sbr.rel (%p215) target = $region32
      $region31: #{tpu_custom_call.1} parent=5 // pred_region
        %s219 = ssub.s32 %s21, 1
        %s220 = sand.u32 %s55, 1
        %s221 = scalar_lea.sflag [#allocation3], %s220
        %s222 = sand.u32 %s55, 1
        %s223 = smul.addr %s222, 32
        %s224 = scalar_lea.vmem [#allocation2], %s223
        // Predicated region
        $region33: #{tpu_custom_call.1} parent=31 // pred_check
          %p225 = pneg %p68
        $region34: #{tpu_custom_call.1} parent=31 // pred_check_branch
          %227 = sbr.rel (%p225) target = $region36
        $region35: #{tpu_custom_call.1} parent=31 // pred_region
          %229 = dma.done %s221, 512
        $region36: #{tpu_custom_call.1} parent=31 // pred_fallthru
          _
        %p230 = pneg %p42
        %p231 = pneg %p39
        %s232 = sand.u32 %s55, 1
        %s233 = scalar_lea.sflag [#allocation3], %s232
        %s234 = sand.u32 %s55, 1
        %s235 = smul.addr %s234, 32
        %s236 = scalar_lea.vmem [#allocation2], %s235
        %p237 = pneg %p68
        %p238 = pneg %p65
        %p239 = pneg %p89
        %p240 = pneg %p86
        %p241 = pneg %p115
        %p242 = pneg %p112
        %s243 = sand.u32 %s102, 1
        %s244 = scalar_lea.sflag [#allocation4], %s243
        %s245 = sand.u32 %s102, 1
        %s246 = smul.addr %s245, 8
        %s247 = scalar_lea.vmem [#allocation5], %s246
        %p248 = pneg %p141
        %p249 = pneg %p138
        %s250 = sand.u32 %s26, 1
        %s251 = scalar_lea.sflag [#allocation7], %s250
        %s252 = sand.u32 %s128, 1
        %s253 = smul.addr %s252, 8
        %s254 = scalar_lea.vmem [#allocation6], %s253
        %p255 = pneg %p167
        %p256 = pneg %p164
        %s257 = sand.u32 %s26, 1
        %s258 = scalar_lea.sflag [#allocation7], %s257
        %s259 = sand.u32 %s154, 1
        %s260 = smul.addr %s259, 8
        %s261 = scalar_lea.vmem [#allocation8], %s260
        %v263 = vld [vmem:[%s0] sm:$0xff]
        %v264 = vmul.f32 %v263, %v263
        %vm265 = vcmask 523264
        %v266 = vsel %vm265, %v264, 0.0
        %267 = vadd.xlane.f32.xlu0 %v266
        %v268 = vpop.xlane.xlu0 %267
        %v269 = vmax.f32 %v268, 1e-24
        %v270 = vrsqrt.pop %v269
        %v271 = vmul.f32 %v270, %v269
        %v272 = vmul.f32 %v271, %v270
        %v273 = vmul.f32 0.5, %v272
        %v274 = vsub.f32 1.5, %v273
        %v275 = vmul.f32 %v270, %v274
        %vm276 = vweird.f32 %v269
        %vm277 = vweird.f32 %v270
        %vm278 = vmor %vm276, %vm277
        %v279 = vsel %vm278, %v270, %v275
        %v280 = vmul.f32 %v263, %v279
        %v281 = vpack.c.bf16 %v280, %v280
        %v282 = vld [vmem:[%s224] sm:$0xf]
        %v283 = vld [vmem:[%s224 + $0x4] sm:$0xf]
        %v284 = vld [vmem:[%s224 + $0x8] sm:$0xf]
        %v285 = vld [vmem:[%s224 + $0xc] sm:$0xf]
        %v286 = vld [vmem:[%s224 + $0x10] sm:$0xf]
        %v287 = vld [vmem:[%s224 + $0x14] sm:$0xf]
        %v288 = vld [vmem:[%s224 + $0x18] sm:$0xf]
        %v289 = vld [vmem:[%s224 + $0x1c] sm:$0xf]
        %v290 = vunpack.c.l.bf16 %v282
        %v291 = vunpack.c.l.bf16 %v283
        %v292 = vunpack.c.l.bf16 %v284
        %v293 = vunpack.c.l.bf16 %v285
        %v294 = vunpack.c.l.bf16 %v286
        %v295 = vunpack.c.l.bf16 %v287
        %v296 = vunpack.c.l.bf16 %v288
        %v297 = vunpack.c.l.bf16 %v289
        %v298 = vmul.f32 %v290, %v290
        %v299 = vmul.f32 %v291, %v291
        %v300 = vmul.f32 %v292, %v292
        %v301 = vmul.f32 %v293, %v293
        %v302 = vmul.f32 %v294, %v294
        %v303 = vmul.f32 %v295, %v295
        %v304 = vmul.f32 %v296, %v296
        %v305 = vmul.f32 %v297, %v297
        %v306 = vadd.f32 %v298, %v299
        %v307 = vadd.f32 %v306, %v300
        %v308 = vadd.f32 %v307, %v301
        %v309 = vadd.f32 %v308, %v302
        %v310 = vadd.f32 %v309, %v303
        %v311 = vadd.f32 %v310, %v304
        %v312 = vadd.f32 %v311, %v305
        %v313 = vrot.slane %v312, 4
        %v314 = vadd.f32 %v312, %v313
        %v315 = vrot.slane %v314, 2
        %v316 = vadd.f32 %v314, %v315
        %v317 = vrot.slane %v316, 1
        %v318 = vadd.f32 %v316, %v317
        %v319 = vmax.f32 %v318, 1e-24
        %v320 = vrsqrt.pop %v319
        %v321 = vmul.f32 %v320, %v319
        %v322 = vmul.f32 %v321, %v320
        %v323 = vmul.f32 0.5, %v322
        %v324 = vsub.f32 1.5, %v323
        %v325 = vmul.f32 %v320, %v324
        %vm326 = vweird.f32 %v319
        %vm327 = vweird.f32 %v320
        %vm328 = vmor %vm326, %vm327
        %v329 = vsel %vm328, %v320, %v325
        %v330 = vmul.f32 %v290, %v329
        %v331 = vmul.f32 %v291, %v329
        %v332 = vmul.f32 %v292, %v329
        %v333 = vmul.f32 %v293, %v329
        %v334 = vmul.f32 %v294, %v329
        %v335 = vmul.f32 %v295, %v329
        %v336 = vmul.f32 %v296, %v329
        %v337 = vmul.f32 %v297, %v329
        %v338 = vpack.c.bf16 %v331, %v330
        %v339 = vpack.c.bf16 %v333, %v332
        %v340 = vpack.c.bf16 %v335, %v334
        %v341 = vpack.c.bf16 %v337, %v336
        %v343 = vsel %vm265, %v281, 0
        %345 = vmatpush.bf16.msra.mxu0 0
        %346 = vmatpush.bf16.msra.mxu0 0
        %347 = vmatpush.bf16.msra.mxu0 0
        %348 = vmatpush.bf16.msra.mxu0 0
        %349 = vmatpush.bf16.msra.mxu0 %v341
        %350 = vmatpush.bf16.msra.mxu0 %v340
        %351 = vmatpush.bf16.msra.mxu0 %v339
        %352 = vmatpush.bf16.msra.mxu0 %v338
        %353 = vmatmul.bf16.gmra.mxu0 %v343
        %v354 = vpop.f32.mrf.mxu0
        %v355 = vadd.f32 0.0, %v354
        %v356 = vpop.f32.mrf.mxu0
        %357 = vdwg.mxu0
        %v358 = vmax.f32 %v355, -0.9999999
        %v359 = vmin.f32 %v358, 0.9999999
        %v360 = vmul.f32 %v359, %v359
        %v361 = vsub.f32 1.0, %v360
        %v362 = vmax.f32 %v361, 0.0
        %v363 = vrsqrt.pop %v362
        %v364 = vmul.f32 %v363, %v362
        %v365 = vmul.f32 %v364, %v363
        %v366 = vmul.f32 0.5, %v365
        %v367 = vsub.f32 1.5, %v366
        %v368 = vmul.f32 %v363, %v367
        %v369 = vmul.f32 %v362, %v368
        %vm370 = vcmp.eq.f32.partialorder %v362, inf
        %v371 = vsel %vm370, %v362, %v369
        %vm372 = vcmp.eq.f32.partialorder %v362, 0.0
        %v373 = vand.u32 %v362, 2147483648
        %v374 = vsel %vm372, %v373, %v371
        %v375 = vmul.f32 %v359, 0.87758255
        %v376 = vmul.f32 %v374, 0.47942555
        %v377 = vsub.f32 %v375, %v376
        %v378 = vld [vmem:[%s2] sm:$0xff]
        %v379 = vlaneseq
        %v380 = vand.u32 %v379, 127
        %s381 = smul.u32 %s26, 128
        %v382 = vstv %s381
        %v383 = vadd.s32 %v380, %v382
        %384 = vset.pattern.permute.xlu0 0
        %385 = vperm.xlu0 %384, %v378
        %v386 = vpop.permute.xlu0 %385
        %vm387 = vcmp.eq.s32.totalorder %v383, %v386
        %v388 = vsel %vm387, 1, 0
        %v389 = vcvt.s32.f32 %v388
        %v390 = vsub.f32 1.0, %v389
        %v391 = vmul.f32 %v355, %v390
        %v392 = vmul.f32 %v377, %v389
        %v393 = vadd.f32 %v391, %v392
        %394 = vst [vmem:[%s247] sm:$0xff] %v393
        %395 = vst [vmem:[%s254] sm:$0xff] %v359
        %vm396 = vcmp.lt.f32.partialorder %v389, 1.0
        %v397 = vmul.f32 %v355, 7.83653
        %v398 = vmul.f32 %v397, 1.442695
        %v399 = vpow.pop %v398
        %v400 = vsel %vm396, %v399, 0.0
        %401 = vadd.xlane.f32.xlu0 %v400
        %v402 = vpop.xlane.xlu0 %401
        %v403 = vrot.slane %v402, 4
        %v404 = vadd.f32 %v402, %v403
        %v405 = vrot.slane %v404, 2
        %v406 = vadd.f32 %v404, %v405
        %v407 = vrot.slane %v406, 1
        %v408 = vadd.f32 %v406, %v407
        %409 = vst [vmem:[%s261] sm:$0xff] %v408
        %s410 = sand.u32 %s102, 1
        %s411 = scalar_lea.sflag [#allocation4], %s410
        %s412 = sand.u32 %s102, 1
        %s413 = smul.addr %s412, 8
        %s414 = scalar_lea.vmem [#allocation5], %s413
        %s415 = sand.u32 %s26, 1
        %s416 = scalar_lea.sflag [#allocation7], %s415
        %s417 = sand.u32 %s128, 1
        %s418 = smul.addr %s417, 8
        %s419 = scalar_lea.vmem [#allocation6], %s418
        %s420 = sand.u32 %s26, 1
        %s421 = scalar_lea.sflag [#allocation7], %s420
        %s422 = sand.u32 %s154, 1
        %s423 = smul.addr %s422, 8
        %s424 = scalar_lea.vmem [#allocation8], %s423
        // Predicated region
        $region37: #{tpu_custom_call.1} parent=31 // pred_check
          %p425 = pneg %p112
        $region38: #{tpu_custom_call.1} parent=31 // pred_check_branch
          %427 = sbr.rel (%p425) target = $region40
        $region39: #{tpu_custom_call.1} parent=31 // pred_region
          %429 = vsyncadd %s411, 0
          %s430 = smul.addr %s26, 8
          %s431 = scalar_lea.hbm %s3, %s430
          %s433 = sshll.u32 %s414, 4
          %s434 = int_to_ptr.vmem [resolvable:$true] %s433
          %s435 = sshll.u32 %s431, 4
          %s436 = int_to_ptr.hbm [resolvable:$true] %s435
          %438 = dma.vmem_to_hbm [thread:$0]  %s434, 128, %s436, %s411
        $region40: #{tpu_custom_call.1} parent=31 // pred_fallthru
          _
        // Predicated region
        $region41: #{tpu_custom_call.1} parent=31 // pred_check
          %p439 = pneg %p138
        $region42: #{tpu_custom_call.1} parent=31 // pred_check_branch
          %441 = sbr.rel (%p439) target = $region44
        $region43: #{tpu_custom_call.1} parent=31 // pred_region
          %443 = vsyncadd %s416, 0
          %s444 = smul.addr %s26, 8
          %s445 = scalar_lea.hbm %s4, %s444
          %s447 = sshll.u32 %s419, 4
          %s448 = int_to_ptr.vmem [resolvable:$true] %s447
          %s449 = sshll.u32 %s445, 4
          %s450 = int_to_ptr.hbm [resolvable:$true] %s449
          %452 = dma.vmem_to_hbm [thread:$0]  %s448, 128, %s450, %s416
        $region44: #{tpu_custom_call.1} parent=31 // pred_fallthru
          _
        // Predicated region
        $region45: #{tpu_custom_call.1} parent=31 // pred_check
          %p453 = pneg %p164
        $region46: #{tpu_custom_call.1} parent=31 // pred_check_branch
          %455 = sbr.rel (%p453) target = $region48
        $region47: #{tpu_custom_call.1} parent=31 // pred_region
          %457 = vsyncadd %s421, 0
          %s458 = smul.addr %s26, 8
          %s459 = scalar_lea.hbm %s5, %s458
          %s461 = sshll.u32 %s424, 4
          %s462 = int_to_ptr.vmem [resolvable:$true] %s461
          %s463 = sshll.u32 %s459, 4
          %s464 = int_to_ptr.hbm [resolvable:$true] %s463
          %466 = dma.vmem_to_hbm [thread:$0]  %s462, 128, %s464, %s421
        $region48: #{tpu_custom_call.1} parent=31 // pred_fallthru
          _
      $region32: #{tpu_custom_call.1} parent=5 // pred_fallthru
        _
      %p467 = scmp.le.s32.totalorder 2, %s21
      // Predicated region
      $region49: #{tpu_custom_call.1} parent=5 // pred_check
        %p468 = pneg %p467
      $region50: #{tpu_custom_call.1} parent=5 // pred_check_branch
        %470 = sbr.rel (%p468) target = $region52
      $region51: #{tpu_custom_call.1} parent=5 // pred_region
        %s471 = ssub.s32 %s21, 2
        // Predicated region
        $region53: #{tpu_custom_call.1} parent=51 // pred_check
          %p472 = pneg %p118
        $region54: #{tpu_custom_call.1} parent=51 // pred_check_branch
          %474 = sbr.rel (%p472) target = $region56
        $region55: #{tpu_custom_call.1} parent=51 // pred_region
          %s475 = sand.u32 %s103, 1
          %s476 = scalar_lea.sflag [#allocation4], %s475
          %s477 = sand.u32 %s103, 1
          %s478 = smul.addr %s477, 8
          %s479 = scalar_lea.vmem [#allocation5], %s478
          %481 = dma.done %s476, 128
        $region56: #{tpu_custom_call.1} parent=51 // pred_fallthru
          _
        // Predicated region
        $region57: #{tpu_custom_call.1} parent=51 // pred_check
          %p482 = pneg %p144
        $region58: #{tpu_custom_call.1} parent=51 // pred_check_branch
          %484 = sbr.rel (%p482) target = $region60
        $region59: #{tpu_custom_call.1} parent=51 // pred_region
          %s485 = sand.u32 %s27, 1
          %s486 = scalar_lea.sflag [#allocation7], %s485
          %s487 = sand.u32 %s129, 1
          %s488 = smul.addr %s487, 8
          %s489 = scalar_lea.vmem [#allocation6], %s488
          %491 = dma.done %s486, 128
        $region60: #{tpu_custom_call.1} parent=51 // pred_fallthru
          _
        // Predicated region
        $region61: #{tpu_custom_call.1} parent=51 // pred_check
          %p492 = pneg %p170
        $region62: #{tpu_custom_call.1} parent=51 // pred_check_branch
          %494 = sbr.rel (%p492) target = $region64
        $region63: #{tpu_custom_call.1} parent=51 // pred_region
          %s495 = sand.u32 %s27, 1
          %s496 = scalar_lea.sflag [#allocation7], %s495
          %s497 = sand.u32 %s155, 1
          %s498 = smul.addr %s497, 8
          %s499 = scalar_lea.vmem [#allocation8], %s498
          %501 = dma.done %s496, 128
        $region64: #{tpu_custom_call.1} parent=51 // pred_fallthru
          _
      $region52: #{tpu_custom_call.1} parent=5 // pred_fallthru
        _
    $region6: #{tpu_custom_call.1} parent=1 // loop_footer
      %s25 = sadd.s32 1, %s21
    $region7: #{tpu_custom_call.1} parent=1 // loop_footer_branch
      %20 = sbr.rel target = $region3
    $region8: #{tpu_custom_call.1} parent=1 // loop_exit
      _
    %502 = vsyncpa [#allocation3], 1
    %s503 = scalar_lea.sflag [#allocation3], 1
    %504 = vsyncpa %s503, 1
    %505 = vsyncpa [#allocation4], 1
    %s506 = scalar_lea.sflag [#allocation4], 1
    %507 = vsyncpa %s506, 1
    %508 = vsyncpa [#allocation7], 1
    %s509 = scalar_lea.sflag [#allocation7], 1
    %510 = vsyncpa %s509, 1

</llo_original>
